<compile_context>
chip_gen: v7x
topology: tpu7x:2x2x1
jax: 0.10.0
libtpu: 0.0.40
codegen_flags: <defaults>
</compile_context>

<pallas_src>
import math

import jax
import jax.numpy as jnp
from jax.experimental import pallas as pl
from jax.experimental.pallas import tpu as pltpu


def _axial_pe_kernel(pe_ref, x_ref, o_ref):
    # x_ref/o_ref blocks: (k, T, V*E); pe_ref block: (T, V*E).
    # Broadcasting add over the leading batch dim; everything stays in the compute dtype.
    o_ref[...] = x_ref[...] + pe_ref[...]


def make_sinusoidal_pe(max_len: int, d_model: int, dtype=jnp.float32) -> jnp.ndarray:
    """pe[t, 0::2] = sin(t * div), pe[t, 1::2] = cos(t * div) — matches the PyTorch init.
    Only even d_model is supported (same effective constraint as the PyTorch buffer)."""
    position = jnp.arange(0, max_len, dtype=jnp.float32)[:, None]            # (L, 1)
    div_term = jnp.exp(
        jnp.arange(0, d_model, 2, dtype=jnp.float32) * -(math.log(10000.0) / d_model)
    )                                                                         # (E/2,)
    angles = position * div_term                                              # (L, E/2)
    pe = jnp.zeros((max_len, d_model), dtype=jnp.float32)
    pe = pe.at[:, 0::2].set(jnp.sin(angles))
    pe = pe.at[:, 1::2].set(jnp.cos(angles))
    return pe.astype(dtype)


def _vmem_capacity_bytes() -> int:
    """Per-core VMEM capacity; conservative fallback (v7x per-TC) if the query fails."""
    try:
        return int(pltpu.get_tpu_info().vmem_capacity_bytes)
    except Exception:
        return 64 * 1024 * 1024


def _pick_batches_per_block(B: int, batches_budget: int) -> int:
    """Largest k such that k divides B (exact grid), k*slab fits the block budget, and the
    grid has >= 2 steps when B >= 2 (so v7x's two TensorCores both get work)."""
    kmax = max(1, min(B, batches_budget))
    if B >= 2:
        kmax = min(kmax, B // 2)
    for k in range(kmax, 0, -1):
        if B % k == 0:
            return k
    return 1


def _run_pallas(pe_rows, x3, *, B, T, VE, k, num_blocks, vmem_limit, itemsize,
                single_buffer_pe):
    pe_spec_kwargs = {}
    if single_buffer_pe:
        # pe's index_map is constant -> it is only DMA'd once; a single buffer suffices.
        pe_spec_kwargs["pipeline_mode"] = pl.Buffered(1)

    return pl.pallas_call(
        _axial_pe_kernel,
        out_shape=jax.ShapeDtypeStruct((B, T, VE), x3.dtype),
        grid_spec=pltpu.PrefetchScalarGridSpec(
            num_scalar_prefetch=0,
            grid=(num_blocks,),
            in_specs=[
                # pe: full (T, VE) block, constant index -> resident in VMEM.
                pl.BlockSpec((T, VE), lambda i: (0, 0), **pe_spec_kwargs),
                # x: (k, T, VE) streaming block; last two dims are full-extent.
                pl.BlockSpec((k, T, VE), lambda i: (i, 0, 0)),
            ],
            out_specs=pl.BlockSpec((k, T, VE), lambda i: (i, 0, 0)),
        ),
        compiler_params=pltpu.CompilerParams(
            dimension_semantics=("parallel",),
            vmem_limit_bytes=vmem_limit,
        ),
        cost_estimate=pl.CostEstimate(
            flops=B * T * VE,
            transcendentals=0,
            bytes_accessed=2 * B * T * VE * itemsize + T * VE * itemsize,
        ),
    )(pe_rows, x3)


def fixed_axial_positional_encoding(x: jnp.ndarray, pe_full: jnp.ndarray) -> jnp.ndarray:
    """x: (B, T, V, E); pe_full: (max_len, E). Returns x + pe[:T] broadcast over B, V."""
    B, T, V, E = x.shape
    VE = V * E
    itemsize = jnp.dtype(x.dtype).itemsize

    # pe for the active sequence length, broadcast over the axial dim, flattened to the
    # lane-dense (T, V*E) layout, cast to the compute dtype. Small (T, VE) wrapper op only.
    pe = pe_full[:T, :].astype(x.dtype)                                       # (T, E)
    pe_rows = jnp.broadcast_to(pe[:, None, :], (T, V, E)).reshape(T, VE)      # (T, V*E)

    # TODO(synk): when V*E is not a multiple of 128, remap to a flat minor dim L with
    # L % 128 == 0 and L | T*V*E for unmasked stores; current layout is still correct
    # (full-extent trailing dims) but uses masked vst for such shapes.

    # --- block sizing, derived from this generation's VMEM capacity ---------------------
    slab_bytes = T * VE * itemsize            # one batch-worth of x (and of pe)
    pe_bytes = slab_bytes                     # resident, single-buffered
    vmem_cap = _vmem_capacity_bytes()
    vmem_budget = int(0.70 * vmem_cap)        # headroom for Mosaic internal scratch

    # x and out blocks are each double-buffered: 4 * block_bytes + pe_bytes <= budget.
    target_block_bytes = min(8 * 1024 * 1024,
                             max(slab_bytes, (vmem_budget - pe_bytes) // 4))
    # TODO(synk): if a single (T, V*E) slab already exceeds the VMEM budget a secondary
    # T-blocking path would be needed; not required for the shapes this module sees.

    batches_budget = max(1, target_block_bytes // max(1, slab_bytes))
    k = _pick_batches_per_block(B, batches_budget)
    num_blocks = B // k
    block_bytes = k * slab_bytes

    need = 4 * block_bytes + pe_bytes + (8 << 20)            # + margin for internal scratch
    vmem_limit = int(min(vmem_cap - (2 << 20), max(need, 32 << 20)))
    vmem_limit = max(vmem_limit, need)                       # never below what we allocate

    x3 = x.reshape(B, T, VE)

    common = dict(B=B, T=T, VE=VE, k=k, num_blocks=num_blocks,
                  vmem_limit=vmem_limit, itemsize=itemsize)
    try:
        out3 = _run_pallas(pe_rows, x3, single_buffer_pe=True, **common)
    except Exception:
        # Safety fallback if single-buffering the resident pe block is rejected.
        out3 = _run_pallas(pe_rows, x3, single_buffer_pe=False, **common)

    return out3.reshape(B, T, V, E)


def reference(x: jnp.ndarray, pe_full: jnp.ndarray) -> jnp.ndarray:
    T = x.shape[1]
    penc = pe_full[:T, :].astype(x.dtype)                 # (T, E)
    return x + penc[None, :, None, :]                     # broadcast over B and V (dropout = id)


if __name__ == "__main__":
    # Small shapes consistent with the module's forward: x of shape (b, t, v, e).
    B, T, V, E = 2, 8, 4, 32
    MAX_LEN = 64
    DROPOUT_P = 0.1  # inference mode -> identity

    key = jax.random.PRNGKey(0)
    x = jax.random.normal(key, (B, T, V, E), dtype=jnp.float32)

    pe_full = make_sinusoidal_pe(MAX_LEN, E)  # deterministic "parameter" (registered buffer)

    out = fixed_axial_positional_encoding(x, pe_full)
    out = jax.block_until_ready(out)

    ref = reference(x, pe_full)
    assert out.shape == x.shape and out.dtype == x.dtype
    assert jnp.allclose(out, ref, atol=1e-6, rtol=1e-6), "mismatch vs reference"

    print("KERNEL_OK")
</pallas_src>

<mosaic_0001>
module attributes {stable_mosaic.version = 11 : i64} {
  func.func @_axial_pe_kernel(%arg0: i32, %arg1: memref<8x128xf32, #tpu.memory_space<vmem>>, %arg2: memref<1x8x128xf32, #tpu.memory_space<vmem>>, %arg3: memref<1x8x128xf32, #tpu.memory_space<vmem>>) attributes {dimension_semantics = [#tpu.dimension_semantics<parallel>], iteration_bounds = array<i64: 2>, scalar_prefetch = 0 : i64, scratch_operands = 0 : i64, tpu.core_type = #tpu.core_type<tc>, window_params = [{pipeline_mode = #tpu.pipeline_mode<synchronous>, transform_indices = @transform_0, window_bounds = array<i64: 8, 128>}, {transform_indices = @transform_1, window_bounds = array<i64: 1, 8, 128>}, {transform_indices = @transform_2, window_bounds = array<i64: 1, 8, 128>}]} {
    %c0 = arith.constant 0 : index
    %c0_0 = arith.constant 0 : index
    %c0_1 = arith.constant 0 : index
    %0 = vector.load %arg2[%c0, %c0_0, %c0_1] : memref<1x8x128xf32, #tpu.memory_space<vmem>>, vector<1x8x128xf32>
    %c0_2 = arith.constant 0 : index
    %c0_3 = arith.constant 0 : index
    %1 = vector.load %arg1[%c0_2, %c0_3] : memref<8x128xf32, #tpu.memory_space<vmem>>, vector<8x128xf32>
    %2 = vector.shape_cast %1 : vector<8x128xf32> to vector<1x8x128xf32>
    %3 = arith.addf %0, %2 : vector<1x8x128xf32>
    %c0_4 = arith.constant 0 : index
    %c0_5 = arith.constant 0 : index
    %c0_6 = arith.constant 0 : index
    %4 = vector.load %arg3[%c0_4, %c0_5, %c0_6] : memref<1x8x128xf32, #tpu.memory_space<vmem>>, vector<1x8x128xf32>
    tpu.vector_store %arg3[%c0_4, %c0_5, %c0_6], %3 {strides = array<i32>} : memref<1x8x128xf32, #tpu.memory_space<vmem>>, vector<1x8x128xf32>,
    return
  }
  func.func @transform_0(%arg0: i32) -> (i32, i32) {
    %c0_i32 = arith.constant 0 : i32
    %c0_i32_0 = arith.constant 0 : i32
    %c0_i32_1 = arith.constant 0 : i32
    return %c0_i32, %c0_i32_0 : i32, i32
  }
  func.func @transform_1(%arg0: i32) -> (i32, i32, i32) {
    %c0_i32 = arith.constant 0 : i32
    %c0_i32_0 = arith.constant 0 : i32
    %c0_i32_1 = arith.constant 0 : i32
    return %arg0, %c0_i32, %c0_i32_0 : i32, i32, i32
  }
  func.func @transform_2(%arg0: i32) -> (i32, i32, i32) {
    %c0_i32 = arith.constant 0 : i32
    %c0_i32_0 = arith.constant 0 : i32
    %c0_i32_1 = arith.constant 0 : i32
    return %arg0, %c0_i32, %c0_i32_0 : i32, i32, i32
  }
}

module attributes {stable_mosaic.version = 11 : i64} {
  func.func @_axial_pe_kernel(%arg0: i32, %arg1: memref<8x128xf32, #tpu.memory_space<vmem>>, %arg2: memref<1x8x128xf32, #tpu.memory_space<vmem>>, %arg3: memref<1x8x128xf32, #tpu.memory_space<vmem>>) attributes {dimension_semantics = [#tpu.dimension_semantics<parallel>], iteration_bounds = array<i64: 2>, scalar_prefetch = 0 : i64, scratch_operands = 0 : i64, tpu.core_type = #tpu.core_type<tc>, window_params = [{pipeline_mode = #tpu.pipeline_mode<synchronous>, transform_indices = @transform_0, window_bounds = array<i64: 8, 128>}, {transform_indices = @transform_1, window_bounds = array<i64: 1, 8, 128>}, {transform_indices = @transform_2, window_bounds = array<i64: 1, 8, 128>}]} {
    %c0 = arith.constant 0 : index
    %c0_0 = arith.constant 0 : index
    %c0_1 = arith.constant 0 : index
    %0 = vector.load %arg2[%c0, %c0_0, %c0_1] : memref<1x8x128xf32, #tpu.memory_space<vmem>>, vector<1x8x128xf32>
    %c0_2 = arith.constant 0 : index
    %c0_3 = arith.constant 0 : index
    %1 = vector.load %arg1[%c0_2, %c0_3] : memref<8x128xf32, #tpu.memory_space<vmem>>, vector<8x128xf32>
    %2 = vector.shape_cast %1 : vector<8x128xf32> to vector<1x8x128xf32>
    %3 = arith.addf %0, %2 : vector<1x8x128xf32>
    %c0_4 = arith.constant 0 : index
    %c0_5 = arith.constant 0 : index
    %c0_6 = arith.constant 0 : index
    %4 = vector.load %arg3[%c0_4, %c0_5, %c0_6] : memref<1x8x128xf32, #tpu.memory_space<vmem>>, vector<1x8x128xf32>
    tpu.vector_store %arg3[%c0_4, %c0_5, %c0_6], %3 {strides = array<i32>} : memref<1x8x128xf32, #tpu.memory_space<vmem>>, vector<1x8x128xf32>,
    return
  }
  func.func @transform_0(%arg0: i32) -> (i32, i32) {
    %c0_i32 = arith.constant 0 : i32
    %c0_i32_0 = arith.constant 0 : i32
    %c0_i32_1 = arith.constant 0 : i32
    return %c0_i32, %c0_i32_0 : i32, i32
  }
  func.func @transform_1(%arg0: i32) -> (i32, i32, i32) {
    %c0_i32 = arith.constant 0 : i32
    %c0_i32_0 = arith.constant 0 : i32
    %c0_i32_1 = arith.constant 0 : i32
    return %arg0, %c0_i32, %c0_i32_0 : i32, i32, i32
  }
  func.func @transform_2(%arg0: i32) -> (i32, i32, i32) {
    %c0_i32 = arith.constant 0 : i32
    %c0_i32_0 = arith.constant 0 : i32
    %c0_i32_1 = arith.constant 0 : i32
    return %arg0, %c0_i32, %c0_i32_0 : i32, i32, i32
  }
}

</mosaic_0001>

<llo_original>
// kernel: tpu_custom_call.1
$region0: #{tpu_custom_call.1}
  #allocation0 [shape = 'u32[]', space=smem, size = 0x4, offset = 0x4, fixed_abs, tag = 'smem constant byte address 0x4 - core index']
  #allocation1 [shape = 'u32[144,128]{1,0:T(1,128)}', space=vmem, size = 0x12000, scoped, tag = 'internal scratch']
  %s0 = inlined_call_operand.hbm [shape: f32[8,128], index: 0, kind: input, shape index: {}]
  %s1 = inlined_call_operand.hbm [shape: f32[2,8,128], index: 1, kind: input, shape index: {}]
  %s2 = inlined_call_operand.hbm [shape: f32[2,8,128], index: 2, kind: output, shape index: {}]
  %s3 = sld [smem:[#allocation0]]
  $region49: #{tpu_custom_call.1} parent=0
    _
  %s5 = ssub.s32 1, %s3
  %s6 = scalar_select 0, %s5, %s3
  $region1: #{tpu_custom_call.1} parent=0
    #allocation2 [shape = 'u8[4096]{0}', space=vmem, size = 0x1000, scoped, tag = 'input window, operand 0, single buffered']
    #allocation3 [shape = 's32[2]{0}', space=sflag, size = 0x8, scoped, tag = 'scoped memory for tpu_custom_call.1']
    #allocation4 [shape = 's32[2]{0}', space=sflag, size = 0x8, scoped, tag = 'scoped memory for tpu_custom_call.1']
    #allocation5 [shape = 'u8[8192]{0}', space=vmem, size = 0x2000, scoped, tag = 'input window, operand 1']
    #allocation6 [shape = 's32[2]{0}', space=sflag, size = 0x8, scoped, tag = 'scoped memory for tpu_custom_call.1']
    #allocation7 [shape = 'u8[8192]{0}', space=vmem, size = 0x2000, scoped, tag = 'output window, operand 0']
    %7 = vsyncpa [#allocation3], 0
    %8 = vsyncpa [#allocation6], 0
    %s9 = scalar_lea.sflag [#allocation6], 1
    %10 = vsyncpa %s9, 0
    %11 = vsyncpa [#allocation4], 0
    %s12 = scalar_lea.sflag [#allocation4], 1
    %13 = vsyncpa %s12, 0
    loop: start=0, step=1, limit=4
    $region2: #{tpu_custom_call.1} parent=1 // loop_pre_header
      _
    $region3: #{tpu_custom_call.1} parent=1 // loop_header
      %s15 = sphi 0, %s19
      %p16 = scmp.ge.s32.totalorder %s15, 4
      %s23 = sphi 0, %s23
      %s25 = sphi 0, %s23
      %s26 = sphi 0, %s25
      %s40 = sphi 0, %s26
      %s46 = sphi 0, %s48
      %s49 = sphi 0, %s46
      %s50 = sphi 0, %s49
      %s66 = sphi 0, %s50
      %s72 = sphi 0, %s74
      %s75 = sphi 0, %s72
      %s76 = sphi 0, %s75
      %s92 = sphi 0, %s76
    $region4: #{tpu_custom_call.1} parent=1 // loop_header_branch
      %18 = sbr.rel (%p16) target = $region8
    $region5: #{tpu_custom_call.1} parent=1 // loop_body
      %s20 = ssub.s32 %s15, 1
      %s21 = ssub.s32 %s15, 2
      %s22 = sadd.s32 %s15, 1
      %s24 = sadd.s32 %s23, 1
      %p27 = scmp.eq.s32.totalorder %s15, 1
      %p28 = scmp.ne.s32.totalorder %s23, %s25
      %p29 = scmp.eq.s32.totalorder %s15, 0
      %p30 = por %p28, %p29
      %p31 = scmp.ne.s32.totalorder %s23, %s25
      %p32 = scmp.eq.s32.totalorder %s20, 1
      %p33 = por %p31, %p32
      %p34 = scmp.ne.s32.totalorder %s25, %s26
      %p35 = scmp.eq.s32.totalorder %s20, 0
      %p36 = por %p34, %p35
      %p37 = scmp.ne.s32.totalorder %s25, %s26
      %p38 = scmp.eq.s32.totalorder %s21, 1
      %p39 = por %p37, %p38
      %p41 = scmp.ne.s32.totalorder %s26, %s40
      %p42 = scmp.eq.s32.totalorder %s21, 0
      %p43 = por %p41, %p42
      %s44 = ssub.s32 %s15, %s22
      %p45 = scmp.eq.s32.totalorder %s44, 0
      %s47 = sadd.s32 %s46, 1
      %s48 = scalar_select %p45, %s46, %s47
      %p51 = pneg %p45
      %p52 = scmp.eq.s32.totalorder %s15, 1
      %p53 = por %p51, %p52
      %p54 = scmp.ne.s32.totalorder %s46, %s49
      %p55 = scmp.eq.s32.totalorder %s15, 0
      %p56 = por %p54, %p55
      %p57 = scmp.ne.s32.totalorder %s46, %s49
      %p58 = scmp.eq.s32.totalorder %s20, 1
      %p59 = por %p57, %p58
      %p60 = scmp.ne.s32.totalorder %s49, %s50
      %p61 = scmp.eq.s32.totalorder %s20, 0
      %p62 = por %p60, %p61
      %p63 = scmp.ne.s32.totalorder %s49, %s50
      %p64 = scmp.eq.s32.totalorder %s21, 1
      %p65 = por %p63, %p64
      %p67 = scmp.ne.s32.totalorder %s50, %s66
      %p68 = scmp.eq.s32.totalorder %s21, 0
      %p69 = por %p67, %p68
      %s70 = ssub.s32 %s15, %s22
      %p71 = scmp.eq.s32.totalorder %s70, 0
      %s73 = sadd.s32 %s72, 1
      %s74 = scalar_select %p71, %s72, %s73
      %p77 = pneg %p71
      %p78 = scmp.eq.s32.totalorder %s15, 1
      %p79 = por %p77, %p78
      %p80 = scmp.ne.s32.totalorder %s72, %s75
      %p81 = scmp.eq.s32.totalorder %s15, 0
      %p82 = por %p80, %p81
      %p83 = scmp.ne.s32.totalorder %s72, %s75
      %p84 = scmp.eq.s32.totalorder %s20, 1
      %p85 = por %p83, %p84
      %p86 = scmp.ne.s32.totalorder %s75, %s76
      %p87 = scmp.eq.s32.totalorder %s20, 0
      %p88 = por %p86, %p87
      %p89 = scmp.ne.s32.totalorder %s75, %s76
      %p90 = scmp.eq.s32.totalorder %s21, 1
      %p91 = por %p89, %p90
      %p93 = scmp.ne.s32.totalorder %s76, %s92
      %p94 = scmp.eq.s32.totalorder %s21, 0
      %p95 = por %p93, %p94
      %p96 = scmp.le.s32.totalorder 1, %s15
      %p97 = scmp.lt.s32.totalorder %s15, 3
      %p98 = pnand %p96, %p97
      %p99 = pneg %p98
      // Predicated region
      $region9: #{tpu_custom_call.1} parent=5 // pred_check
        _
      $region10: #{tpu_custom_call.1} parent=5 // pred_check_branch
        %101 = sbr.rel (%p98) target = $region12
      $region11: #{tpu_custom_call.1} parent=5 // pred_region
        %s102 = ssub.s32 %s15, 1
        // Predicated region
        $region13: #{tpu_custom_call.1} parent=11 // pred_check
          %p103 = pneg %p36
        $region14: #{tpu_custom_call.1} parent=11 // pred_check_branch
          %105 = sbr.rel (%p103) target = $region16
        $region15: #{tpu_custom_call.1} parent=11 // pred_region
          %s107 = ssub.s32 128, 128
          %108 = vsyncadd [#allocation3], %s107
          %s110 = sshll.u32 [#allocation2], 4
          %s111 = int_to_ptr.vmem [resolvable:$true] %s110
          %113 = dma.hbm_to_vmem [thread:$0]  %s0, 128, %s111, [#allocation3]
        $region16: #{tpu_custom_call.1} parent=11 // pred_fallthru
          _
      $region12: #{tpu_custom_call.1} parent=5 // pred_fallthru
        _
      %p114 = scmp.lt.s32.totalorder %s15, 2
      // Predicated region
      $region17: #{tpu_custom_call.1} parent=5 // pred_check
        %p115 = pneg %p114
      $region18: #{tpu_custom_call.1} parent=5 // pred_check_branch
        %117 = sbr.rel (%p115) target = $region20
      $region19: #{tpu_custom_call.1} parent=5 // pred_region
        // Predicated region
        $region21: #{tpu_custom_call.1} parent=19 // pred_check
          %p118 = pneg %p56
        $region22: #{tpu_custom_call.1} parent=19 // pred_check_branch
          %120 = sbr.rel (%p118) target = $region24
        $region23: #{tpu_custom_call.1} parent=19 // pred_region
          %s121 = sand.u32 %s46, 1
          %s122 = scalar_lea.sflag [#allocation6], %s121
          %s123 = sand.u32 %s46, 1
          %s124 = smul.addr %s123, 8
          %s125 = scalar_lea.vmem [#allocation5], %s124
          %s127 = ssub.s32 128, 128
          %128 = vsyncadd %s122, %s127
          %s129 = smul.addr %s15, 128
          %s130 = scalar_lea.hbm %s1, %s129
          %s132 = sshll.u32 %s125, 4
          %s133 = int_to_ptr.vmem [resolvable:$true] %s132
          %135 = dma.hbm_to_vmem [thread:$0]  %s130, 128, %s133, %s122
        $region24: #{tpu_custom_call.1} parent=19 // pred_fallthru
          _
      $region20: #{tpu_custom_call.1} parent=5 // pred_fallthru
        _
      %p136 = scmp.le.s32.totalorder 1, %s15
      %p137 = scmp.lt.s32.totalorder %s15, 3
      %p138 = pnand %p136, %p137
      %p139 = pneg %p138
      // Predicated region
      $region25: #{tpu_custom_call.1} parent=5 // pred_check
        _
      $region26: #{tpu_custom_call.1} parent=5 // pred_check_branch
        %141 = sbr.rel (%p138) target = $region28
      $region27: #{tpu_custom_call.1} parent=5 // pred_region
        %s142 = ssub.s32 %s15, 1
        // Predicated region
        $region29: #{tpu_custom_call.1} parent=27 // pred_check
          %p143 = pneg %p36
        $region30: #{tpu_custom_call.1} parent=27 // pred_check_branch
          %145 = sbr.rel (%p143) target = $region32
        $region31: #{tpu_custom_call.1} parent=27 // pred_region
          %146 = dma.done [#allocation3], 128
        $region32: #{tpu_custom_call.1} parent=27 // pred_fallthru
          _
        %s147 = sand.u32 %s49, 1
        %s148 = scalar_lea.sflag [#allocation6], %s147
        %s149 = sand.u32 %s49, 1
        %s150 = smul.addr %s149, 8
        %s151 = scalar_lea.vmem [#allocation5], %s150
        // Predicated region
        $region33: #{tpu_custom_call.1} parent=27 // pred_check
          %p152 = pneg %p62
        $region34: #{tpu_custom_call.1} parent=27 // pred_check_branch
          %154 = sbr.rel (%p152) target = $region36
        $region35: #{tpu_custom_call.1} parent=27 // pred_region
          %155 = dma.done %s148, 128
        $region36: #{tpu_custom_call.1} parent=27 // pred_fallthru
          _
        %p156 = pneg %p36
        %p157 = pneg %p33
        %s158 = sand.u32 %s49, 1
        %s159 = scalar_lea.sflag [#allocation6], %s158
        %s160 = sand.u32 %s49, 1
        %s161 = smul.addr %s160, 8
        %s162 = scalar_lea.vmem [#allocation5], %s161
        %p163 = pneg %p62
        %p164 = pneg %p59
        %p165 = pneg %p88
        %p166 = pneg %p85
        %s167 = sand.u32 %s75, 1
        %s168 = scalar_lea.sflag [#allocation4], %s167
        %s169 = sand.u32 %s75, 1
        %s170 = smul.addr %s169, 8
        %s171 = scalar_lea.vmem [#allocation7], %s170
        %v172 = vld [vmem:[%s151] sm:$0xff]
        %v173 = vld [vmem:[#allocation2] sm:$0xff]
        %v174 = vadd.f32 %v172, %v173
        %175 = vst [vmem:[%s171] sm:$0xff] %v174
        %s176 = sand.u32 %s75, 1
        %s177 = scalar_lea.sflag [#allocation4], %s176
        %s178 = sand.u32 %s75, 1
        %s179 = smul.addr %s178, 8
        %s180 = scalar_lea.vmem [#allocation7], %s179
        // Predicated region
        $region37: #{tpu_custom_call.1} parent=27 // pred_check
          %p181 = pneg %p85
        $region38: #{tpu_custom_call.1} parent=27 // pred_check_branch
          %183 = sbr.rel (%p181) target = $region40
        $region39: #{tpu_custom_call.1} parent=27 // pred_region
          %s185 = ssub.s32 128, 128
          %186 = vsyncadd %s177, %s185
          %s187 = smul.addr %s20, 128
          %s188 = scalar_lea.hbm %s2, %s187
          %s190 = sshll.u32 %s180, 4
          %s191 = int_to_ptr.vmem [resolvable:$true] %s190
          %193 = dma.vmem_to_hbm [thread:$0]  %s191, 128, %s188, %s177
        $region40: #{tpu_custom_call.1} parent=27 // pred_fallthru
          _
      $region28: #{tpu_custom_call.1} parent=5 // pred_fallthru
        _
      %p194 = scmp.le.s32.totalorder 2, %s15
      // Predicated region
      $region41: #{tpu_custom_call.1} parent=5 // pred_check
        %p195 = pneg %p194
      $region42: #{tpu_custom_call.1} parent=5 // pred_check_branch
        %197 = sbr.rel (%p195) target = $region44
      $region43: #{tpu_custom_call.1} parent=5 // pred_region
        %s198 = ssub.s32 %s15, 2
        // Predicated region
        $region45: #{tpu_custom_call.1} parent=43 // pred_check
          %p199 = pneg %p91
        $region46: #{tpu_custom_call.1} parent=43 // pred_check_branch
          %201 = sbr.rel (%p199) target = $region48
        $region47: #{tpu_custom_call.1} parent=43 // pred_region
          %s202 = sand.u32 %s76, 1
          %s203 = scalar_lea.sflag [#allocation4], %s202
          %s204 = sand.u32 %s76, 1
          %s205 = smul.addr %s204, 8
          %s206 = scalar_lea.vmem [#allocation7], %s205
          %207 = dma.done %s203, 128
        $region48: #{tpu_custom_call.1} parent=43 // pred_fallthru
          _
      $region44: #{tpu_custom_call.1} parent=5 // pred_fallthru
        _
    $region6: #{tpu_custom_call.1} parent=1 // loop_footer
      %s19 = sadd.s32 1, %s15
    $region7: #{tpu_custom_call.1} parent=1 // loop_footer_branch
      %14 = sbr.rel target = $region3
    $region8: #{tpu_custom_call.1} parent=1 // loop_exit
      _
    %208 = vsyncpa [#allocation3], 1
    %s209 = scalar_lea.sflag [#allocation3], 1
    %210 = vsyncpa %s209, 1
    %211 = vsyncpa [#allocation6], 1
    %s212 = scalar_lea.sflag [#allocation6], 1
    %213 = vsyncpa %s212, 1
    %214 = vsyncpa [#allocation4], 1
    %s215 = scalar_lea.sflag [#allocation4], 1
    %216 = vsyncpa %s215, 1

// kernel: tpu_custom_call.1
$region0: #{tpu_custom_call.1}
  #allocation0 [shape = 'u32[]', space=smem, size = 0x4, offset = 0x4, fixed_abs, tag = 'smem constant byte address 0x4 - core index']
  #allocation1 [shape = 'u32[144,128]{1,0:T(1,128)}', space=vmem, size = 0x12000, scoped, tag = 'internal scratch']
  %s0 = inlined_call_operand.hbm [shape: f32[8,128], index: 0, kind: input, shape index: {}]
  %s1 = inlined_call_operand.hbm [shape: f32[2,8,128], index: 1, kind: input, shape index: {}]
  %s2 = inlined_call_operand.hbm [shape: f32[2,8,128], index: 2, kind: output, shape index: {}]
  %s3 = sld [smem:[#allocation0]]
  $region49: #{tpu_custom_call.1} parent=0
    _
  %s5 = ssub.s32 1, %s3
  %s6 = scalar_select 0, %s5, %s3
  $region1: #{tpu_custom_call.1} parent=0
    #allocation2 [shape = 'u8[4096]{0}', space=vmem, size = 0x1000, scoped, tag = 'input window, operand 0, single buffered']
    #allocation3 [shape = 's32[2]{0}', space=sflag, size = 0x8, scoped, tag = 'scoped memory for tpu_custom_call.1']
    #allocation4 [shape = 's32[2]{0}', space=sflag, size = 0x8, scoped, tag = 'scoped memory for tpu_custom_call.1']
    #allocation5 [shape = 'u8[8192]{0}', space=vmem, size = 0x2000, scoped, tag = 'input window, operand 1']
    #allocation6 [shape = 's32[2]{0}', space=sflag, size = 0x8, scoped, tag = 'scoped memory for tpu_custom_call.1']
    #allocation7 [shape = 'u8[8192]{0}', space=vmem, size = 0x2000, scoped, tag = 'output window, operand 0']
    %7 = vsyncpa [#allocation3], 0
    %8 = vsyncpa [#allocation6], 0
    %s9 = scalar_lea.sflag [#allocation6], 1
    %10 = vsyncpa %s9, 0
    %11 = vsyncpa [#allocation4], 0
    %s12 = scalar_lea.sflag [#allocation4], 1
    %13 = vsyncpa %s12, 0
    loop: start=0, step=1, limit=4
    $region2: #{tpu_custom_call.1} parent=1 // loop_pre_header
      _
    $region3: #{tpu_custom_call.1} parent=1 // loop_header
      %s15 = sphi 0, %s19
      %p16 = scmp.ge.s32.totalorder %s15, 4
      %s23 = sphi 0, %s23
      %s25 = sphi 0, %s23
      %s26 = sphi 0, %s25
      %s40 = sphi 0, %s26
      %s46 = sphi 0, %s48
      %s49 = sphi 0, %s46
      %s50 = sphi 0, %s49
      %s66 = sphi 0, %s50
      %s72 = sphi 0, %s74
      %s75 = sphi 0, %s72
      %s76 = sphi 0, %s75
      %s92 = sphi 0, %s76
    $region4: #{tpu_custom_call.1} parent=1 // loop_header_branch
      %18 = sbr.rel (%p16) target = $region8
    $region5: #{tpu_custom_call.1} parent=1 // loop_body
      %s20 = ssub.s32 %s15, 1
      %s21 = ssub.s32 %s15, 2
      %s22 = sadd.s32 %s15, 1
      %s24 = sadd.s32 %s23, 1
      %p27 = scmp.eq.s32.totalorder %s15, 1
      %p28 = scmp.ne.s32.totalorder %s23, %s25
      %p29 = scmp.eq.s32.totalorder %s15, 0
      %p30 = por %p28, %p29
      %p31 = scmp.ne.s32.totalorder %s23, %s25
      %p32 = scmp.eq.s32.totalorder %s20, 1
      %p33 = por %p31, %p32
      %p34 = scmp.ne.s32.totalorder %s25, %s26
      %p35 = scmp.eq.s32.totalorder %s20, 0
      %p36 = por %p34, %p35
      %p37 = scmp.ne.s32.totalorder %s25, %s26
      %p38 = scmp.eq.s32.totalorder %s21, 1
      %p39 = por %p37, %p38
      %p41 = scmp.ne.s32.totalorder %s26, %s40
      %p42 = scmp.eq.s32.totalorder %s21, 0
      %p43 = por %p41, %p42
      %s44 = ssub.s32 %s15, %s22
      %p45 = scmp.eq.s32.totalorder %s44, 0
      %s47 = sadd.s32 %s46, 1
      %s48 = scalar_select %p45, %s46, %s47
      %p51 = pneg %p45
      %p52 = scmp.eq.s32.totalorder %s15, 1
      %p53 = por %p51, %p52
      %p54 = scmp.ne.s32.totalorder %s46, %s49
      %p55 = scmp.eq.s32.totalorder %s15, 0
      %p56 = por %p54, %p55
      %p57 = scmp.ne.s32.totalorder %s46, %s49
      %p58 = scmp.eq.s32.totalorder %s20, 1
      %p59 = por %p57, %p58
      %p60 = scmp.ne.s32.totalorder %s49, %s50
      %p61 = scmp.eq.s32.totalorder %s20, 0
      %p62 = por %p60, %p61
      %p63 = scmp.ne.s32.totalorder %s49, %s50
      %p64 = scmp.eq.s32.totalorder %s21, 1
      %p65 = por %p63, %p64
      %p67 = scmp.ne.s32.totalorder %s50, %s66
      %p68 = scmp.eq.s32.totalorder %s21, 0
      %p69 = por %p67, %p68
      %s70 = ssub.s32 %s15, %s22
      %p71 = scmp.eq.s32.totalorder %s70, 0
      %s73 = sadd.s32 %s72, 1
      %s74 = scalar_select %p71, %s72, %s73
      %p77 = pneg %p71
      %p78 = scmp.eq.s32.totalorder %s15, 1
      %p79 = por %p77, %p78
      %p80 = scmp.ne.s32.totalorder %s72, %s75
      %p81 = scmp.eq.s32.totalorder %s15, 0
      %p82 = por %p80, %p81
      %p83 = scmp.ne.s32.totalorder %s72, %s75
      %p84 = scmp.eq.s32.totalorder %s20, 1
      %p85 = por %p83, %p84
      %p86 = scmp.ne.s32.totalorder %s75, %s76
      %p87 = scmp.eq.s32.totalorder %s20, 0
      %p88 = por %p86, %p87
      %p89 = scmp.ne.s32.totalorder %s75, %s76
      %p90 = scmp.eq.s32.totalorder %s21, 1
      %p91 = por %p89, %p90
      %p93 = scmp.ne.s32.totalorder %s76, %s92
      %p94 = scmp.eq.s32.totalorder %s21, 0
      %p95 = por %p93, %p94
      %p96 = scmp.le.s32.totalorder 1, %s15
      %p97 = scmp.lt.s32.totalorder %s15, 3
      %p98 = pnand %p96, %p97
      %p99 = pneg %p98
      // Predicated region
      $region9: #{tpu_custom_call.1} parent=5 // pred_check
        _
      $region10: #{tpu_custom_call.1} parent=5 // pred_check_branch
        %101 = sbr.rel (%p98) target = $region12
      $region11: #{tpu_custom_call.1} parent=5 // pred_region
        %s102 = ssub.s32 %s15, 1
        // Predicated region
        $region13: #{tpu_custom_call.1} parent=11 // pred_check
          %p103 = pneg %p36
        $region14: #{tpu_custom_call.1} parent=11 // pred_check_branch
          %105 = sbr.rel (%p103) target = $region16
        $region15: #{tpu_custom_call.1} parent=11 // pred_region
          %s107 = ssub.s32 128, 128
          %108 = vsyncadd [#allocation3], %s107
          %s110 = sshll.u32 [#allocation2], 4
          %s111 = int_to_ptr.vmem [resolvable:$true] %s110
          %113 = dma.hbm_to_vmem [thread:$0]  %s0, 128, %s111, [#allocation3]
        $region16: #{tpu_custom_call.1} parent=11 // pred_fallthru
          _
      $region12: #{tpu_custom_call.1} parent=5 // pred_fallthru
        _
      %p114 = scmp.lt.s32.totalorder %s15, 2
      // Predicated region
      $region17: #{tpu_custom_call.1} parent=5 // pred_check
        %p115 = pneg %p114
      $region18: #{tpu_custom_call.1} parent=5 // pred_check_branch
        %117 = sbr.rel (%p115) target = $region20
      $region19: #{tpu_custom_call.1} parent=5 // pred_region
        // Predicated region
        $region21: #{tpu_custom_call.1} parent=19 // pred_check
          %p118 = pneg %p56
        $region22: #{tpu_custom_call.1} parent=19 // pred_check_branch
          %120 = sbr.rel (%p118) target = $region24
        $region23: #{tpu_custom_call.1} parent=19 // pred_region
          %s121 = sand.u32 %s46, 1
          %s122 = scalar_lea.sflag [#allocation6], %s121
          %s123 = sand.u32 %s46, 1
          %s124 = smul.addr %s123, 8
          %s125 = scalar_lea.vmem [#allocation5], %s124
          %s127 = ssub.s32 128, 128
          %128 = vsyncadd %s122, %s127
          %s129 = smul.addr %s15, 128
          %s130 = scalar_lea.hbm %s1, %s129
          %s132 = sshll.u32 %s125, 4
          %s133 = int_to_ptr.vmem [resolvable:$true] %s132
          %135 = dma.hbm_to_vmem [thread:$0]  %s130, 128, %s133, %s122
        $region24: #{tpu_custom_call.1} parent=19 // pred_fallthru
          _
      $region20: #{tpu_custom_call.1} parent=5 // pred_fallthru
        _
      %p136 = scmp.le.s32.totalorder 1, %s15
      %p137 = scmp.lt.s32.totalorder %s15, 3
      %p138 = pnand %p136, %p137
      %p139 = pneg %p138
      // Predicated region
      $region25: #{tpu_custom_call.1} parent=5 // pred_check
        _
      $region26: #{tpu_custom_call.1} parent=5 // pred_check_branch
        %141 = sbr.rel (%p138) target = $region28
      $region27: #{tpu_custom_call.1} parent=5 // pred_region
        %s142 = ssub.s32 %s15, 1
        // Predicated region
        $region29: #{tpu_custom_call.1} parent=27 // pred_check
          %p143 = pneg %p36
        $region30: #{tpu_custom_call.1} parent=27 // pred_check_branch
          %145 = sbr.rel (%p143) target = $region32
        $region31: #{tpu_custom_call.1} parent=27 // pred_region
          %146 = dma.done [#allocation3], 128
        $region32: #{tpu_custom_call.1} parent=27 // pred_fallthru
          _
        %s147 = sand.u32 %s49, 1
        %s148 = scalar_lea.sflag [#allocation6], %s147
        %s149 = sand.u32 %s49, 1
        %s150 = smul.addr %s149, 8
        %s151 = scalar_lea.vmem [#allocation5], %s150
        // Predicated region
        $region33: #{tpu_custom_call.1} parent=27 // pred_check
          %p152 = pneg %p62
        $region34: #{tpu_custom_call.1} parent=27 // pred_check_branch
          %154 = sbr.rel (%p152) target = $region36
        $region35: #{tpu_custom_call.1} parent=27 // pred_region
          %155 = dma.done %s148, 128
        $region36: #{tpu_custom_call.1} parent=27 // pred_fallthru
          _
        %p156 = pneg %p36
        %p157 = pneg %p33
        %s158 = sand.u32 %s49, 1
        %s159 = scalar_lea.sflag [#allocation6], %s158
        %s160 = sand.u32 %s49, 1
        %s161 = smul.addr %s160, 8
        %s162 = scalar_lea.vmem [#allocation5], %s161
        %p163 = pneg %p62
        %p164 = pneg %p59
        %p165 = pneg %p88
        %p166 = pneg %p85
        %s167 = sand.u32 %s75, 1
        %s168 = scalar_lea.sflag [#allocation4], %s167
        %s169 = sand.u32 %s75, 1
        %s170 = smul.addr %s169, 8
        %s171 = scalar_lea.vmem [#allocation7], %s170
        %v172 = vld [vmem:[%s151] sm:$0xff]
        %v173 = vld [vmem:[#allocation2] sm:$0xff]
        %v174 = vadd.f32 %v172, %v173
        %175 = vst [vmem:[%s171] sm:$0xff] %v174
        %s176 = sand.u32 %s75, 1
        %s177 = scalar_lea.sflag [#allocation4], %s176
        %s178 = sand.u32 %s75, 1
        %s179 = smul.addr %s178, 8
        %s180 = scalar_lea.vmem [#allocation7], %s179
        // Predicated region
        $region37: #{tpu_custom_call.1} parent=27 // pred_check
          %p181 = pneg %p85
        $region38: #{tpu_custom_call.1} parent=27 // pred_check_branch
          %183 = sbr.rel (%p181) target = $region40
        $region39: #{tpu_custom_call.1} parent=27 // pred_region
          %s185 = ssub.s32 128, 128
          %186 = vsyncadd %s177, %s185
          %s187 = smul.addr %s20, 128
          %s188 = scalar_lea.hbm %s2, %s187
          %s190 = sshll.u32 %s180, 4
          %s191 = int_to_ptr.vmem [resolvable:$true] %s190
          %193 = dma.vmem_to_hbm [thread:$0]  %s191, 128, %s188, %s177
        $region40: #{tpu_custom_call.1} parent=27 // pred_fallthru
          _
      $region28: #{tpu_custom_call.1} parent=5 // pred_fallthru
        _
      %p194 = scmp.le.s32.totalorder 2, %s15
      // Predicated region
      $region41: #{tpu_custom_call.1} parent=5 // pred_check
        %p195 = pneg %p194
      $region42: #{tpu_custom_call.1} parent=5 // pred_check_branch
        %197 = sbr.rel (%p195) target = $region44
      $region43: #{tpu_custom_call.1} parent=5 // pred_region
        %s198 = ssub.s32 %s15, 2
        // Predicated region
        $region45: #{tpu_custom_call.1} parent=43 // pred_check
          %p199 = pneg %p91
        $region46: #{tpu_custom_call.1} parent=43 // pred_check_branch
          %201 = sbr.rel (%p199) target = $region48
        $region47: #{tpu_custom_call.1} parent=43 // pred_region
          %s202 = sand.u32 %s76, 1
          %s203 = scalar_lea.sflag [#allocation4], %s202
          %s204 = sand.u32 %s76, 1
          %s205 = smul.addr %s204, 8
          %s206 = scalar_lea.vmem [#allocation7], %s205
          %207 = dma.done %s203, 128
        $region48: #{tpu_custom_call.1} parent=43 // pred_fallthru
          _
      $region44: #{tpu_custom_call.1} parent=5 // pred_fallthru
        _
    $region6: #{tpu_custom_call.1} parent=1 // loop_footer
      %s19 = sadd.s32 1, %s15
    $region7: #{tpu_custom_call.1} parent=1 // loop_footer_branch
      %14 = sbr.rel target = $region3
    $region8: #{tpu_custom_call.1} parent=1 // loop_exit
      _
    %208 = vsyncpa [#allocation3], 1
    %s209 = scalar_lea.sflag [#allocation3], 1
    %210 = vsyncpa %s209, 1
    %211 = vsyncpa [#allocation6], 1
    %s212 = scalar_lea.sflag [#allocation6], 1
    %213 = vsyncpa %s212, 1
    %214 = vsyncpa [#allocation4], 1
    %s215 = scalar_lea.sflag [#allocation4], 1
    %216 = vsyncpa %s215, 1

</llo_original>
